<compile_context>
chip_gen: v6e
topology: v6e:2x2x1
jax: 0.10.0
libtpu: 0.0.40
codegen_flags: <defaults>
</compile_context>

<pallas_src>
import functools

import jax
import jax.numpy as jnp
from jax import lax
from jax.experimental import pallas as pl
from jax.experimental.pallas import tpu as pltpu
import numpy as np

LN_EPS = 1e-5  # torch.nn.LayerNorm default


def _round_up(x, m):
    return ((x + m - 1) // m) * m


def _encoder_mlp_kernel(x_ref, w1_ref, b1_ref, w2_ref, b2_ref,
                        g_ref, beta_ref, w3_ref, b3_ref, o_ref, *, hidden_dim):
    """One row-tile of the MLP encoder; weights stay VMEM-resident across the grid."""

    def to_mxu(v, w_ref):
        # bf16 operands feed the MXU at native rate on v5e/v6e/v7x; the f32 path is
        # kept for the bit-accurate precision="f32" mode.  Accumulation is always f32.
        return v.astype(jnp.bfloat16) if w_ref.dtype == jnp.bfloat16 else v.astype(jnp.float32)

    x = x_ref[...]

    # fc1 + ReLU
    h = jnp.dot(to_mxu(x, w1_ref), w1_ref[...], preferred_element_type=jnp.float32)
    h = jnp.maximum(h + b1_ref[...].astype(jnp.float32), 0.0)

    # fc2
    h = jnp.dot(to_mxu(h, w2_ref), w2_ref[...], preferred_element_type=jnp.float32)
    h = h + b2_ref[...].astype(jnp.float32)

    # LayerNorm over the true hidden_dim, two-pass variance (matches the torch / ref
    # formulation).  Padded lanes [hidden_dim, hp) are exactly zero by construction
    # (zero-padded w1/w2/b1/b2) and are masked out of the variance reduction; gamma is
    # zero-padded so they stay zero afterwards.
    hp = h.shape[-1]
    inv_hid = 1.0 / float(hidden_dim)
    mean = jnp.sum(h, axis=-1, keepdims=True) * inv_hid
    d = h - mean
    if hp != hidden_dim:
        lane = lax.broadcasted_iota(jnp.int32, (1, hp), 1)
        d = jnp.where(lane < hidden_dim, d, 0.0)
    var = jnp.sum(d * d, axis=-1, keepdims=True) * inv_hid
    h = d * lax.rsqrt(var + LN_EPS)
    h = h * g_ref[...].astype(jnp.float32) + beta_ref[...].astype(jnp.float32)

    # ReLU + fc3 (output columns zero-padded to a multiple of 128 lanes: unmasked vst).
    h = jnp.maximum(h, 0.0)
    out = jnp.dot(to_mxu(h, w3_ref), w3_ref[...], preferred_element_type=jnp.float32)
    o_ref[...] = (out + b3_ref[...].astype(jnp.float32)).astype(o_ref.dtype)


def encoder_mlp_forward(ins, params, *, num_objects, input_dim,
                        row_tile=1024, precision="bf16"):
    """Pallas-backed EncoderMLP.forward.

    ins: any shape that flattens to (-1, num_objects, input_dim).
    precision: "bf16" (MXU-native weights, ~1e-2 tolerance vs f32 reference) or "f32".
    Returns (B, num_objects, output_dim).
    """
    w1, b1, w2, b2, g, beta, w3, b3 = params
    hidden_dim = w1.shape[1]
    output_dim = w3.shape[1]

    h_flat = ins.reshape(-1, num_objects, input_dim)      # ins.view(-1, K, D)
    batch = h_flat.shape[0]
    m = batch * num_objects
    x2d = h_flat.reshape(m, input_dim)

    # ---- lane-dense padding: hidden_dim and output_dim -> multiples of 128 ----
    hp = _round_up(hidden_dim, 128)
    n_pad = _round_up(output_dim, 128)
    if hp != hidden_dim:
        dh = hp - hidden_dim
        w1 = jnp.pad(w1, ((0, 0), (0, dh)))
        b1 = jnp.pad(b1, ((0, 0), (0, dh)))
        w2 = jnp.pad(w2, ((0, dh), (0, dh)))
        b2 = jnp.pad(b2, ((0, 0), (0, dh)))
        g = jnp.pad(g, ((0, 0), (0, dh)))                 # gamma padded with ZEROS
        beta = jnp.pad(beta, ((0, 0), (0, dh)))
        w3 = jnp.pad(w3, ((0, dh), (0, 0)))
    if n_pad != output_dim:
        w3 = jnp.pad(w3, ((0, 0), (0, n_pad - output_dim)))
        b3 = jnp.pad(b3, ((0, 0), (0, n_pad - output_dim)))

    # ---- MXU-native weights: bf16 matmul operands, f32 accumulation ----
    if precision == "bf16":
        w1 = w1.astype(jnp.bfloat16)
        w2 = w2.astype(jnp.bfloat16)
        w3 = w3.astype(jnp.bfloat16)
    # biases / LayerNorm params stay f32.

    x_itemsize = x2d.dtype.itemsize
    out_itemsize = jnp.dtype(ins.dtype).itemsize
    weight_bytes = sum(int(a.size) * a.dtype.itemsize
                       for a in (w1, b1, w2, b2, g, beta, w3, b3))

    # ---- generation-aware VMEM budget (v5e/v6e: 128 MiB, v7x: 64 MiB per TC) ----
    try:
        vmem_cap = int(pltpu.get_tpu_info().vmem_capacity_bytes)
    except Exception:
        vmem_cap = 64 * 1024 * 1024            # conservative fallback (v7x per-TC)
    vmem_ceiling = max(16 * 1024 * 1024, int(vmem_cap * 0.8))

    def vmem_estimate(rt):
        # double-buffered x/out streams + single-buffered resident weights + f32 temps
        return (2 * rt * (input_dim * x_itemsize + n_pad * out_itemsize)
                + weight_bytes
                + 4 * rt * hp * 4)

    # ---- row tile: as big as the VMEM budget allows, multiple of 8 sublanes,
    #      and clamped so the grid has >= 2 steps (balances the 2 v7x TensorCores).
    rt = max(8, min(_round_up(int(row_tile), 8), _round_up(m, 8)))
    while rt > 8 and vmem_estimate(rt) > vmem_ceiling:
        rt = max(8, (rt // 2) // 8 * 8)
    rt = min(rt, max(8, _round_up(pl.cdiv(m, 2), 8)))
    grid = (pl.cdiv(m, rt),)                   # ragged last block handled by Pallas

    vmem_limit = int(min(max(2 * vmem_estimate(rt), 16 * 1024 * 1024), vmem_ceiling))

    row_spec_in = pl.BlockSpec((rt, input_dim), lambda i: (i, 0))
    row_spec_out = pl.BlockSpec((rt, n_pad), lambda i: (i, 0))

    def resident(a):
        # Constant index map -> DMA'd once; single-buffer to halve resident VMEM.
        return pl.BlockSpec(a.shape, lambda i: (0,) * a.ndim,
                            pipeline_mode=pl.Buffered(1))

    flops = 2 * m * (input_dim * hp + hp * hp + hp * n_pad)
    bytes_accessed = (int(x2d.size) * x_itemsize + weight_bytes + m * n_pad * out_itemsize)
    cost = pl.CostEstimate(flops=int(flops), transcendentals=int(m),
                           bytes_accessed=int(bytes_accessed))

    # TODO(synk): for very large hidden_dim (bf16 w2 >~ 32 MiB on v7x) stream w2/w3 over
    # an extra "arbitrary" K/N grid axis with a VMEM accumulator instead of holding them
    # fully resident.
    out2d = pl.pallas_call(
        functools.partial(_encoder_mlp_kernel, hidden_dim=hidden_dim),
        out_shape=jax.ShapeDtypeStruct((m, n_pad), ins.dtype),
        grid_spec=pltpu.PrefetchScalarGridSpec(
            num_scalar_prefetch=0,
            grid=grid,
            in_specs=[
                row_spec_in,                   # x tile (streamed, double-buffered)
                resident(w1), resident(b1),
                resident(w2), resident(b2),
                resident(g), resident(beta),
                resident(w3), resident(b3),
            ],
            out_specs=row_spec_out,
        ),
        compiler_params=pltpu.CompilerParams(
            dimension_semantics=("parallel",),
            vmem_limit_bytes=vmem_limit,
        ),
        cost_estimate=cost,
    )(x2d, w1, b1, w2, b2, g, beta, w3, b3)

    return out2d[:, :output_dim].reshape(batch, num_objects, output_dim)


def init_params(key, input_dim, hidden_dim, output_dim):
    """Deterministic synthetic parameters (PyTorch Linear convention: W is (out,in);
    we store the transpose (in,out) for the kernel). Biases/LN params kept 2-D (1, F)."""
    ks = jax.random.split(key, 6)

    def lin(kw, kb, fan_in, fan_out):
        bound = 1.0 / np.sqrt(fan_in)
        w = jax.random.uniform(kw, (fan_in, fan_out), jnp.float32, -bound, bound)
        b = jax.random.uniform(kb, (1, fan_out), jnp.float32, -bound, bound)
        return w, b

    w1, b1 = lin(ks[0], ks[1], input_dim, hidden_dim)
    w2, b2 = lin(ks[2], ks[3], hidden_dim, hidden_dim)
    w3, b3 = lin(ks[4], ks[5], hidden_dim, output_dim)
    g = jnp.ones((1, hidden_dim), jnp.float32)       # LayerNorm weight
    beta = jnp.zeros((1, hidden_dim), jnp.float32)   # LayerNorm bias
    return (w1, b1, w2, b2, g, beta, w3, b3)


def reference_forward(ins, params, *, num_objects, input_dim):
    """Pure-JAX reference mirroring the PyTorch module (f32, two-pass LayerNorm)."""
    w1, b1, w2, b2, g, beta, w3, b3 = params
    h = ins.reshape(-1, num_objects, input_dim)
    h = jnp.maximum(h @ w1 + b1, 0.0)
    h = h @ w2 + b2
    mean = jnp.mean(h, axis=-1, keepdims=True)
    var = jnp.mean(jnp.square(h - mean), axis=-1, keepdims=True)
    h = (h - mean) / jnp.sqrt(var + LN_EPS) * g + beta
    h = jnp.maximum(h, 0.0)
    return h @ w3 + b3


if __name__ == "__main__":
    # Small shapes consistent with the module.
    batch, num_objects, input_dim, hidden_dim, output_dim = 2, 4, 16, 32, 8

    key = jax.random.PRNGKey(0)
    k_x, k_p = jax.random.split(key)
    params = init_params(k_p, input_dim, hidden_dim, output_dim)

    # Observation as the module would receive it (anything view-able to (-1, K, D)).
    x = jax.random.normal(k_x, (batch, num_objects * input_dim), jnp.float32)

    ref = reference_forward(x, params, num_objects=num_objects, input_dim=input_dim)

    # Bit-accurate path (f32 weights) against the PyTorch-equivalent reference.
    fwd_f32 = jax.jit(functools.partial(encoder_mlp_forward, num_objects=num_objects,
                                        input_dim=input_dim, precision="f32"))
    out_f32 = jax.block_until_ready(fwd_f32(x, params))
    assert out_f32.shape == (batch, num_objects, output_dim)
    np.testing.assert_allclose(np.asarray(out_f32), np.asarray(ref), rtol=1e-5, atol=1e-5)

    # Performance default: bf16 weights on the MXU (documented tolerance ~1e-2).
    fwd = jax.jit(functools.partial(encoder_mlp_forward, num_objects=num_objects,
                                    input_dim=input_dim))
    out = jax.block_until_ready(fwd(x, params))
    assert out.shape == (batch, num_objects, output_dim)
    np.testing.assert_allclose(np.asarray(out), np.asarray(ref), rtol=3e-2, atol=3e-2)

    print("KERNEL_OK")
</pallas_src>

<mosaic_0001>
module attributes {stable_mosaic.version = 11 : i64} {
  func.func @_encoder_mlp_kernel(%arg0: i32, %arg1: memref<8x16xf32, #tpu.memory_space<vmem>>, %arg2: memref<16x128xf32, #tpu.memory_space<vmem>>, %arg3: memref<1x128xf32, #tpu.memory_space<vmem>>, %arg4: memref<128x128xf32, #tpu.memory_space<vmem>>, %arg5: memref<1x128xf32, #tpu.memory_space<vmem>>, %arg6: memref<1x128xf32, #tpu.memory_space<vmem>>, %arg7: memref<1x128xf32, #tpu.memory_space<vmem>>, %arg8: memref<128x128xf32, #tpu.memory_space<vmem>>, %arg9: memref<1x128xf32, #tpu.memory_space<vmem>>, %arg10: memref<8x128xf32, #tpu.memory_space<vmem>>) attributes {dimension_semantics = [#tpu.dimension_semantics<parallel>], iteration_bounds = array<i64: 1>, scalar_prefetch = 0 : i64, scratch_operands = 0 : i64, tpu.core_type = #tpu.core_type<tc>, window_params = [{transform_indices = @transform_0, window_bounds = array<i64: 8, 16>}, {pipeline_mode = #tpu.pipeline_mode<synchronous>, transform_indices = @transform_1, window_bounds = array<i64: 16, 128>}, {pipeline_mode = #tpu.pipeline_mode<synchronous>, transform_indices = @transform_2, window_bounds = array<i64: 1, 128>}, {pipeline_mode = #tpu.pipeline_mode<synchronous>, transform_indices = @transform_3, window_bounds = array<i64: 128, 128>}, {pipeline_mode = #tpu.pipeline_mode<synchronous>, transform_indices = @transform_4, window_bounds = array<i64: 1, 128>}, {pipeline_mode = #tpu.pipeline_mode<synchronous>, transform_indices = @transform_5, window_bounds = array<i64: 1, 128>}, {pipeline_mode = #tpu.pipeline_mode<synchronous>, transform_indices = @transform_6, window_bounds = array<i64: 1, 128>}, {pipeline_mode = #tpu.pipeline_mode<synchronous>, transform_indices = @transform_7, window_bounds = array<i64: 128, 128>}, {pipeline_mode = #tpu.pipeline_mode<synchronous>, transform_indices = @transform_8, window_bounds = array<i64: 1, 128>}, {transform_indices = @transform_9, window_bounds = array<i64: 8, 128>}]} {
    %c0 = arith.constant 0 : index
    %c0_0 = arith.constant 0 : index
    %0 = vector.load %arg1[%c0, %c0_0] : memref<8x16xf32, #tpu.memory_space<vmem>>, vector<8x16xf32>
    %c0_1 = arith.constant 0 : index
    %c0_2 = arith.constant 0 : index
    %1 = vector.load %arg2[%c0_1, %c0_2] : memref<16x128xf32, #tpu.memory_space<vmem>>, vector<16x128xf32>
    %cst = arith.constant dense<0.000000e+00> : vector<8x128xf32>
    %2 = tpu.matmul %0, %1, %cst {dimension_numbers = #tpu.dot_dimension_numbers<[1], [0], [0], [1], [0, 0, 1, 1], [], []>} : vector<8x16xf32>, vector<16x128xf32>, vector<8x128xf32> -> vector<8x128xf32>
    %c0_3 = arith.constant 0 : index
    %c0_4 = arith.constant 0 : index
    %3 = vector.load %arg3[%c0_3, %c0_4] : memref<1x128xf32, #tpu.memory_space<vmem>>, vector<1x128xf32>
    %4 = vector.broadcast %3 : vector<1x128xf32> to vector<8x128xf32>
    %5 = arith.addf %2, %4 : vector<8x128xf32>
    %cst_5 = arith.constant 0.000000e+00 : f32
    %6 = vector.broadcast %cst_5 : f32 to vector<8x128xf32>
    %7 = arith.maximumf %5, %6 : vector<8x128xf32>
    %c0_6 = arith.constant 0 : index
    %c0_7 = arith.constant 0 : index
    %8 = vector.load %arg4[%c0_6, %c0_7] : memref<128x128xf32, #tpu.memory_space<vmem>>, vector<128x128xf32>
    %cst_8 = arith.constant dense<0.000000e+00> : vector<8x128xf32>
    %9 = tpu.matmul %7, %8, %cst_8 {dimension_numbers = #tpu.dot_dimension_numbers<[1], [0], [0], [1], [0, 0, 1, 1], [], []>} : vector<8x128xf32>, vector<128x128xf32>, vector<8x128xf32> -> vector<8x128xf32>
    %c0_9 = arith.constant 0 : index
    %c0_10 = arith.constant 0 : index
    %10 = vector.load %arg5[%c0_9, %c0_10] : memref<1x128xf32, #tpu.memory_space<vmem>>, vector<1x128xf32>
    %11 = vector.broadcast %10 : vector<1x128xf32> to vector<8x128xf32>
    %12 = arith.addf %9, %11 : vector<8x128xf32>
    %cst_11 = arith.constant dense<0.000000e+00> : vector<8xf32>
    %13 = vector.multi_reduction <add>, %12, %cst_11 [1] : vector<8x128xf32> to vector<8xf32>
    %14 = vector.shape_cast %13 : vector<8xf32> to vector<8x1xf32>
    %cst_12 = arith.constant 3.125000e-02 : f32
    %15 = vector.broadcast %cst_12 : f32 to vector<8x1xf32>
    %16 = arith.mulf %14, %15 : vector<8x1xf32>
    %17 = vector.broadcast %16 : vector<8x1xf32> to vector<8x128xf32>
    %18 = arith.subf %12, %17 : vector<8x128xf32>
    %19 = tpu.iota {dimensions = array<i32: 1>} : vector<1x128xi32>
    %c32_i32 = arith.constant 32 : i32
    %20 = vector.broadcast %c32_i32 : i32 to vector<1x128xi32>
    %21 = arith.cmpi slt, %19, %20 : vector<1x128xi32>
    %cst_13 = arith.constant 0.000000e+00 : f32
    %22 = vector.shape_cast %21 : vector<1x128xi1> to vector<1x128xi1>
    %23 = vector.broadcast %22 : vector<1x128xi1> to vector<8x128xi1>
    %24 = vector.broadcast %cst_13 : f32 to vector<8x128xf32>
    %25 = arith.select %23, %18, %24 : vector<8x128xi1>, vector<8x128xf32>
    %26 = arith.mulf %25, %25 : vector<8x128xf32>
    %cst_14 = arith.constant dense<0.000000e+00> : vector<8xf32>
    %27 = vector.multi_reduction <add>, %26, %cst_14 [1] : vector<8x128xf32> to vector<8xf32>
    %28 = vector.shape_cast %27 : vector<8xf32> to vector<8x1xf32>
    %cst_15 = arith.constant 3.125000e-02 : f32
    %29 = vector.broadcast %cst_15 : f32 to vector<8x1xf32>
    %30 = arith.mulf %28, %29 : vector<8x1xf32>
    %cst_16 = arith.constant 9.99999974E-6 : f32
    %31 = vector.broadcast %cst_16 : f32 to vector<8x1xf32>
    %32 = arith.addf %30, %31 : vector<8x1xf32>
    %33 = math.rsqrt %32 : vector<8x1xf32>
    %34 = vector.broadcast %33 : vector<8x1xf32> to vector<8x128xf32>
    %35 = arith.mulf %25, %34 : vector<8x128xf32>
    %c0_17 = arith.constant 0 : index
    %c0_18 = arith.constant 0 : index
    %36 = vector.load %arg6[%c0_17, %c0_18] : memref<1x128xf32, #tpu.memory_space<vmem>>, vector<1x128xf32>
    %37 = vector.broadcast %36 : vector<1x128xf32> to vector<8x128xf32>
    %38 = arith.mulf %35, %37 : vector<8x128xf32>
    %c0_19 = arith.constant 0 : index
    %c0_20 = arith.constant 0 : index
    %39 = vector.load %arg7[%c0_19, %c0_20] : memref<1x128xf32, #tpu.memory_space<vmem>>, vector<1x128xf32>
    %40 = vector.broadcast %39 : vector<1x128xf32> to vector<8x128xf32>
    %41 = arith.addf %38, %40 : vector<8x128xf32>
    %cst_21 = arith.constant 0.000000e+00 : f32
    %42 = vector.broadcast %cst_21 : f32 to vector<8x128xf32>
    %43 = arith.maximumf %41, %42 : vector<8x128xf32>
    %c0_22 = arith.constant 0 : index
    %c0_23 = arith.constant 0 : index
    %44 = vector.load %arg8[%c0_22, %c0_23] : memref<128x128xf32, #tpu.memory_space<vmem>>, vector<128x128xf32>
    %cst_24 = arith.constant dense<0.000000e+00> : vector<8x128xf32>
    %45 = tpu.matmul %43, %44, %cst_24 {dimension_numbers = #tpu.dot_dimension_numbers<[1], [0], [0], [1], [0, 0, 1, 1], [], []>} : vector<8x128xf32>, vector<128x128xf32>, vector<8x128xf32> -> vector<8x128xf32>
    %c0_25 = arith.constant 0 : index
    %c0_26 = arith.constant 0 : index
    %46 = vector.load %arg9[%c0_25, %c0_26] : memref<1x128xf32, #tpu.memory_space<vmem>>, vector<1x128xf32>
    %47 = vector.broadcast %46 : vector<1x128xf32> to vector<8x128xf32>
    %48 = arith.addf %45, %47 : vector<8x128xf32>
    %c0_27 = arith.constant 0 : index
    %c0_28 = arith.constant 0 : index
    %49 = vector.load %arg10[%c0_27, %c0_28] : memref<8x128xf32, #tpu.memory_space<vmem>>, vector<8x128xf32>
    tpu.vector_store %arg10[%c0_27, %c0_28], %48 {strides = array<i32>} : memref<8x128xf32, #tpu.memory_space<vmem>>, vector<8x128xf32>,
    return
  }
  func.func @transform_0(%arg0: i32) -> (i32, i32) {
    %c0_i32 = arith.constant 0 : i32
    %c0_i32_0 = arith.constant 0 : i32
    return %arg0, %c0_i32 : i32, i32
  }
  func.func @transform_1(%arg0: i32) -> (i32, i32) {
    %c0_i32 = arith.constant 0 : i32
    %c0_i32_0 = arith.constant 0 : i32
    %c0_i32_1 = arith.constant 0 : i32
    return %c0_i32, %c0_i32_0 : i32, i32
  }
  func.func @transform_2(%arg0: i32) -> (i32, i32) {
    %c0_i32 = arith.constant 0 : i32
    %c0_i32_0 = arith.constant 0 : i32
    %c0_i32_1 = arith.constant 0 : i32
    return %c0_i32, %c0_i32_0 : i32, i32
  }
  func.func @transform_3(%arg0: i32) -> (i32, i32) {
    %c0_i32 = arith.constant 0 : i32
    %c0_i32_0 = arith.constant 0 : i32
    %c0_i32_1 = arith.constant 0 : i32
    return %c0_i32, %c0_i32_0 : i32, i32
  }
  func.func @transform_4(%arg0: i32) -> (i32, i32) {
    %c0_i32 = arith.constant 0 : i32
    %c0_i32_0 = arith.constant 0 : i32
    %c0_i32_1 = arith.constant 0 : i32
    return %c0_i32, %c0_i32_0 : i32, i32
  }
  func.func @transform_5(%arg0: i32) -> (i32, i32) {
    %c0_i32 = arith.constant 0 : i32
    %c0_i32_0 = arith.constant 0 : i32
    %c0_i32_1 = arith.constant 0 : i32
    return %c0_i32, %c0_i32_0 : i32, i32
  }
  func.func @transform_6(%arg0: i32) -> (i32, i32) {
    %c0_i32 = arith.constant 0 : i32
    %c0_i32_0 = arith.constant 0 : i32
    %c0_i32_1 = arith.constant 0 : i32
    return %c0_i32, %c0_i32_0 : i32, i32
  }
  func.func @transform_7(%arg0: i32) -> (i32, i32) {
    %c0_i32 = arith.constant 0 : i32
    %c0_i32_0 = arith.constant 0 : i32
    %c0_i32_1 = arith.constant 0 : i32
    return %c0_i32, %c0_i32_0 : i32, i32
  }
  func.func @transform_8(%arg0: i32) -> (i32, i32) {
    %c0_i32 = arith.constant 0 : i32
    %c0_i32_0 = arith.constant 0 : i32
    %c0_i32_1 = arith.constant 0 : i32
    return %c0_i32, %c0_i32_0 : i32, i32
  }
  func.func @transform_9(%arg0: i32) -> (i32, i32) {
    %c0_i32 = arith.constant 0 : i32
    %c0_i32_0 = arith.constant 0 : i32
    return %arg0, %c0_i32 : i32, i32
  }
}

</mosaic_0001>

<llo_original>
// kernel: encoder_mlp_forward.1
$region0: #{encoder_mlp_forward.1}
  #allocation0 [shape = 'u32[]', space=smem, size = 0x4, offset = 0x4, fixed_abs, tag = 'smem constant byte address 0x4 - core index']
  #allocation1 [shape = 'u32[144,128]{1,0:T(1,128)}', space=vmem, size = 0x12000, scoped, tag = 'internal scratch']
  %s0 = inlined_call_operand.vmem [shape: f32[8,16], index: 0, kind: input, shape index: {}]
  %s1 = inlined_call_operand.vmem [shape: f32[16,128], index: 1, kind: input, shape index: {}]
  %s2 = inlined_call_operand.vmem [shape: f32[1,128], index: 2, kind: input, shape index: {}]
  %s3 = inlined_call_operand.vmem [shape: f32[128,128], index: 3, kind: input, shape index: {}]
  %s4 = inlined_call_operand.vmem [shape: f32[1,128], index: 4, kind: input, shape index: {}]
  %s5 = inlined_call_operand.vmem [shape: f32[1,128], index: 5, kind: input, shape index: {}]
  %s6 = inlined_call_operand.vmem [shape: f32[1,128], index: 6, kind: input, shape index: {}]
  %s7 = inlined_call_operand.vmem [shape: f32[128,128], index: 7, kind: input, shape index: {}]
  %s8 = inlined_call_operand.vmem [shape: f32[1,128], index: 8, kind: input, shape index: {}]
  %s9 = inlined_call_operand.hbm [shape: f32[8,128], index: 9, kind: output, shape index: {}]
  %s10 = sld [smem:[#allocation0]]
  $region46: #{encoder_mlp_forward.1} parent=0
    _
  %s12 = ssub.s32 1, %s10
  %s13 = scalar_select 0, %s12, %s10
  $region1: #{encoder_mlp_forward.1} parent=0
    #allocation2 [shape = 'u8[4096]{0}', space=vmem, size = 0x1000, scoped, tag = 'output window, operand 0, single buffered']
    #allocation3 [shape = 's32[1]{0}', space=sflag, size = 0x4, scoped, tag = 'scoped memory for encoder_mlp_forward.1']
    %14 = vsyncpa [#allocation3], 0
    // Predicated region
    $region2: #{encoder_mlp_forward.1} parent=1 // pred_check
      _
    $region3: #{encoder_mlp_forward.1} parent=1 // pred_check_branch
      %16 = sbr.rel (0) target = $region5
    $region4: #{encoder_mlp_forward.1} parent=1 // pred_region
      _
    $region5: #{encoder_mlp_forward.1} parent=1 // pred_fallthru
      _
    // Predicated region
    $region6: #{encoder_mlp_forward.1} parent=1 // pred_check
      _
    $region7: #{encoder_mlp_forward.1} parent=1 // pred_check_branch
      %18 = sbr.rel (0) target = $region9
    $region8: #{encoder_mlp_forward.1} parent=1 // pred_region
      _
    $region9: #{encoder_mlp_forward.1} parent=1 // pred_fallthru
      _
    // Predicated region
    $region10: #{encoder_mlp_forward.1} parent=1 // pred_check
      _
    $region11: #{encoder_mlp_forward.1} parent=1 // pred_check_branch
      %20 = sbr.rel (0) target = $region13
    $region12: #{encoder_mlp_forward.1} parent=1 // pred_region
      _
    $region13: #{encoder_mlp_forward.1} parent=1 // pred_fallthru
      _
    // Predicated region
    $region14: #{encoder_mlp_forward.1} parent=1 // pred_check
      _
    $region15: #{encoder_mlp_forward.1} parent=1 // pred_check_branch
      %22 = sbr.rel (0) target = $region17
    $region16: #{encoder_mlp_forward.1} parent=1 // pred_region
      _
    $region17: #{encoder_mlp_forward.1} parent=1 // pred_fallthru
      _
    // Predicated region
    $region18: #{encoder_mlp_forward.1} parent=1 // pred_check
      _
    $region19: #{encoder_mlp_forward.1} parent=1 // pred_check_branch
      %24 = sbr.rel (0) target = $region21
    $region20: #{encoder_mlp_forward.1} parent=1 // pred_region
      _
    $region21: #{encoder_mlp_forward.1} parent=1 // pred_fallthru
      _
    // Predicated region
    $region22: #{encoder_mlp_forward.1} parent=1 // pred_check
      _
    $region23: #{encoder_mlp_forward.1} parent=1 // pred_check_branch
      %26 = sbr.rel (0) target = $region25
    $region24: #{encoder_mlp_forward.1} parent=1 // pred_region
      _
    $region25: #{encoder_mlp_forward.1} parent=1 // pred_fallthru
      _
    // Predicated region
    $region26: #{encoder_mlp_forward.1} parent=1 // pred_check
      _
    $region27: #{encoder_mlp_forward.1} parent=1 // pred_check_branch
      %28 = sbr.rel (0) target = $region29
    $region28: #{encoder_mlp_forward.1} parent=1 // pred_region
      _
    $region29: #{encoder_mlp_forward.1} parent=1 // pred_fallthru
      _
    // Predicated region
    $region30: #{encoder_mlp_forward.1} parent=1 // pred_check
      _
    $region31: #{encoder_mlp_forward.1} parent=1 // pred_check_branch
      %30 = sbr.rel (0) target = $region33
    $region32: #{encoder_mlp_forward.1} parent=1 // pred_region
      _
    $region33: #{encoder_mlp_forward.1} parent=1 // pred_fallthru
      _
    // Predicated region
    $region34: #{encoder_mlp_forward.1} parent=1 // pred_check
      _
    $region35: #{encoder_mlp_forward.1} parent=1 // pred_check_branch
      %32 = sbr.rel (0) target = $region37
    $region36: #{encoder_mlp_forward.1} parent=1 // pred_region
      _
    $region37: #{encoder_mlp_forward.1} parent=1 // pred_fallthru
      _
    %v33 = vld [vmem:[%s0] sm:$0xff]
    %v34 = vld [vmem:[%s1] sm:$0xff]
    %v35 = vld [vmem:[%s1 + $0x8] sm:$0xff]
    %v36 = vld [vmem:[%s2] sm:$0x1]
    %v38 = vlaneseq
    %v39 = vshrl.u32 %v38, 7
    %v40 = vsub.s32 0, %v39
    %v41 = vrot.slane %v36, %v40
    %vm43 = vcmask 130048
    %v45 = vsel %vm43, %v33, 0
    %47 = vmatprep.subr.mxu0 0.0
    %48 = vmatpush1.msra.mxu0 0.0
    %49 = vmatprep.subr.mxu0 0.0
    %50 = vmatpush1.msra.mxu0 0.0
    %51 = vmatprep.subr.mxu0 0.0
    %52 = vmatpush1.msra.mxu0 0.0
    %53 = vmatprep.subr.mxu0 0.0
    %54 = vmatpush1.msra.mxu0 0.0
    %55 = vmatprep.subr.mxu0 0.0
    %56 = vmatpush1.msra.mxu0 0.0
    %57 = vmatprep.subr.mxu0 0.0
    %58 = vmatpush1.msra.mxu0 0.0
    %59 = vmatprep.subr.mxu0 0.0
    %60 = vmatpush1.msra.mxu0 0.0
    %61 = vmatprep.subr.mxu0 0.0
    %62 = vmatpush1.msra.mxu0 0.0
    %63 = vmatprep.subr.mxu0 0.0
    %64 = vmatpush1.msra.mxu0 0.0
    %65 = vmatprep.subr.mxu0 0.0
    %66 = vmatpush1.msra.mxu0 0.0
    %67 = vmatprep.subr.mxu0 0.0
    %68 = vmatpush1.msra.mxu0 0.0
    %69 = vmatprep.subr.mxu0 0.0
    %70 = vmatpush1.msra.mxu0 0.0
    %71 = vmatprep.subr.mxu0 0.0
    %72 = vmatpush1.msra.mxu0 0.0
    %73 = vmatprep.subr.mxu0 0.0
    %74 = vmatpush1.msra.mxu0 0.0
    %75 = vmatprep.subr.mxu0 0.0
    %76 = vmatpush1.msra.mxu0 %v35
    %77 = vmatprep.subr.mxu0 0.0
    %78 = vmatpush1.msra.mxu0 %v34
    %79 = vmatprep.subr.mxu0 0.0
    %80 = vmatpush2.msra.mxu0 0.0
    %81 = vmatprep.subr.mxu0 0.0
    %82 = vmatpush2.msra.mxu0 0.0
    %83 = vmatprep.subr.mxu0 0.0
    %84 = vmatpush2.msra.mxu0 0.0
    %85 = vmatprep.subr.mxu0 0.0
    %86 = vmatpush2.msra.mxu0 0.0
    %87 = vmatprep.subr.mxu0 0.0
    %88 = vmatpush2.msra.mxu0 0.0
    %89 = vmatprep.subr.mxu0 0.0
    %90 = vmatpush2.msra.mxu0 0.0
    %91 = vmatprep.subr.mxu0 0.0
    %92 = vmatpush2.msra.mxu0 0.0
    %93 = vmatprep.subr.mxu0 0.0
    %94 = vmatpush2.msra.mxu0 0.0
    %95 = vmatprep.subr.mxu0 0.0
    %96 = vmatpush2.msra.mxu0 0.0
    %97 = vmatprep.subr.mxu0 0.0
    %98 = vmatpush2.msra.mxu0 0.0
    %99 = vmatprep.subr.mxu0 0.0
    %100 = vmatpush2.msra.mxu0 0.0
    %101 = vmatprep.subr.mxu0 0.0
    %102 = vmatpush2.msra.mxu0 0.0
    %103 = vmatprep.subr.mxu0 0.0
    %104 = vmatpush2.msra.mxu0 0.0
    %105 = vmatprep.subr.mxu0 0.0
    %106 = vmatpush2.msra.mxu0 0.0
    %107 = vmatprep.subr.mxu0 0.0
    %108 = vmatpush2.msra.mxu0 0.0
    %109 = vmatprep.subr.mxu0 0.0
    %110 = vmatpush2.msra.mxu0 0.0
    %111 = vmatprep.mubr.f32.mxu0 0.0
    %112 = vmatmul.mubr.f32.gmra.mxu0 %v45
    %v113 = vpop.f32.mrf.mxu0
    %v114 = vadd.f32 %v41, %v113
    %v115 = vpop.f32.mrf.mxu0
    %116 = vdwg.mxu0
    %v117 = vmax.f32 %v114, 0.0
    %v118 = vld [vmem:[%s3] sm:$0xff]
    %v119 = vld [vmem:[%s3 + $0x8] sm:$0xff]
    %v120 = vld [vmem:[%s3 + $0x10] sm:$0xff]
    %v121 = vld [vmem:[%s3 + $0x18] sm:$0xff]
    %v122 = vld [vmem:[%s3 + $0x20] sm:$0xff]
    %v123 = vld [vmem:[%s3 + $0x28] sm:$0xff]
    %v124 = vld [vmem:[%s3 + $0x30] sm:$0xff]
    %v125 = vld [vmem:[%s3 + $0x38] sm:$0xff]
    %v126 = vld [vmem:[%s3 + $0x40] sm:$0xff]
    %v127 = vld [vmem:[%s3 + $0x48] sm:$0xff]
    %v128 = vld [vmem:[%s3 + $0x50] sm:$0xff]
    %v129 = vld [vmem:[%s3 + $0x58] sm:$0xff]
    %v130 = vld [vmem:[%s3 + $0x60] sm:$0xff]
    %v131 = vld [vmem:[%s3 + $0x68] sm:$0xff]
    %v132 = vld [vmem:[%s3 + $0x70] sm:$0xff]
    %v133 = vld [vmem:[%s3 + $0x78] sm:$0xff]
    %v134 = vld [vmem:[%s4] sm:$0x1]
    %v136 = vlaneseq
    %v137 = vshrl.u32 %v136, 7
    %v138 = vsub.s32 0, %v137
    %v139 = vrot.slane %v134, %v138
    %141 = vmatprep.subr.mxu0 0.0
    %142 = vmatpush1.msra.mxu0 %v133
    %143 = vmatprep.subr.mxu0 0.0
    %144 = vmatpush1.msra.mxu0 %v132
    %145 = vmatprep.subr.mxu0 0.0
    %146 = vmatpush1.msra.mxu0 %v131
    %147 = vmatprep.subr.mxu0 0.0
    %148 = vmatpush1.msra.mxu0 %v130
    %149 = vmatprep.subr.mxu0 0.0
    %150 = vmatpush1.msra.mxu0 %v129
    %151 = vmatprep.subr.mxu0 0.0
    %152 = vmatpush1.msra.mxu0 %v128
    %153 = vmatprep.subr.mxu0 0.0
    %154 = vmatpush1.msra.mxu0 %v127
    %155 = vmatprep.subr.mxu0 0.0
    %156 = vmatpush1.msra.mxu0 %v126
    %157 = vmatprep.subr.mxu0 0.0
    %158 = vmatpush1.msra.mxu0 %v125
    %159 = vmatprep.subr.mxu0 0.0
    %160 = vmatpush1.msra.mxu0 %v124
    %161 = vmatprep.subr.mxu0 0.0
    %162 = vmatpush1.msra.mxu0 %v123
    %163 = vmatprep.subr.mxu0 0.0
    %164 = vmatpush1.msra.mxu0 %v122
    %165 = vmatprep.subr.mxu0 0.0
    %166 = vmatpush1.msra.mxu0 %v121
    %167 = vmatprep.subr.mxu0 0.0
    %168 = vmatpush1.msra.mxu0 %v120
    %169 = vmatprep.subr.mxu0 0.0
    %170 = vmatpush1.msra.mxu0 %v119
    %171 = vmatprep.subr.mxu0 0.0
    %172 = vmatpush1.msra.mxu0 %v118
    %173 = vmatprep.subr.mxu0 0.0
    %174 = vmatpush2.msra.mxu0 0.0
    %175 = vmatprep.subr.mxu0 0.0
    %176 = vmatpush2.msra.mxu0 0.0
    %177 = vmatprep.subr.mxu0 0.0
    %178 = vmatpush2.msra.mxu0 0.0
    %179 = vmatprep.subr.mxu0 0.0
    %180 = vmatpush2.msra.mxu0 0.0
    %181 = vmatprep.subr.mxu0 0.0
    %182 = vmatpush2.msra.mxu0 0.0
    %183 = vmatprep.subr.mxu0 0.0
    %184 = vmatpush2.msra.mxu0 0.0
    %185 = vmatprep.subr.mxu0 0.0
    %186 = vmatpush2.msra.mxu0 0.0
    %187 = vmatprep.subr.mxu0 0.0
    %188 = vmatpush2.msra.mxu0 0.0
    %189 = vmatprep.subr.mxu0 0.0
    %190 = vmatpush2.msra.mxu0 0.0
    %191 = vmatprep.subr.mxu0 0.0
    %192 = vmatpush2.msra.mxu0 0.0
    %193 = vmatprep.subr.mxu0 0.0
    %194 = vmatpush2.msra.mxu0 0.0
    %195 = vmatprep.subr.mxu0 0.0
    %196 = vmatpush2.msra.mxu0 0.0
    %197 = vmatprep.subr.mxu0 0.0
    %198 = vmatpush2.msra.mxu0 0.0
    %199 = vmatprep.subr.mxu0 0.0
    %200 = vmatpush2.msra.mxu0 0.0
    %201 = vmatprep.subr.mxu0 0.0
    %202 = vmatpush2.msra.mxu0 0.0
    %203 = vmatprep.subr.mxu0 0.0
    %204 = vmatpush2.msra.mxu0 0.0
    %205 = vmatprep.mubr.f32.mxu0 0.0
    %206 = vmatmul.mubr.f32.gmra.mxu0 %v117
    %v207 = vpop.f32.mrf.mxu0
    %v208 = vadd.f32 %v139, %v207
    %v209 = vpop.f32.mrf.mxu0
    %210 = vdwg.mxu0
    %211 = vadd.xlane.f32.xlu0 %v208
    %v212 = vpop.xlane.xlu0 %211
    %v213 = vmul.f32 %v212, 0.03125
    %v214 = vsub.f32 %v208, %v213
    %v215 = vlaneseq
    %v216 = vand.u32 %v215, 127
    %vm217 = vcmp.lt.s32.totalorder %v216, 32
    %v218 = vsel %vm217, 1, 0
    %vm219 = vcmp.eq.s32.totalorder %v218, 1
    %v220 = vsel %vm219, %v214, 0.0
    %v221 = vmul.f32 %v220, %v220
    %222 = vadd.xlane.f32.xlu0 %v221
    %v223 = vpop.xlane.xlu0 %222
    %v224 = vmul.f32 %v223, 0.03125
    %v225 = vadd.f32 %v224, 1e-05
    %v226 = vrsqrt.pop %v225
    %v227 = vmul.f32 %v220, %v226
    %v228 = vld [vmem:[%s5] sm:$0x1]
    %v230 = vlaneseq
    %v231 = vshrl.u32 %v230, 7
    %v232 = vsub.s32 0, %v231
    %v233 = vrot.slane %v228, %v232
    %v235 = vmul.f32 %v227, %v233
    %v236 = vld [vmem:[%s6] sm:$0x1]
    %v238 = vlaneseq
    %v239 = vshrl.u32 %v238, 7
    %v240 = vsub.s32 0, %v239
    %v241 = vrot.slane %v236, %v240
    %v243 = vadd.f32 %v235, %v241
    %v244 = vmax.f32 %v243, 0.0
    %v245 = vld [vmem:[%s7] sm:$0xff]
    %v246 = vld [vmem:[%s7 + $0x8] sm:$0xff]
    %v247 = vld [vmem:[%s7 + $0x10] sm:$0xff]
    %v248 = vld [vmem:[%s7 + $0x18] sm:$0xff]
    %v249 = vld [vmem:[%s7 + $0x20] sm:$0xff]
    %v250 = vld [vmem:[%s7 + $0x28] sm:$0xff]
    %v251 = vld [vmem:[%s7 + $0x30] sm:$0xff]
    %v252 = vld [vmem:[%s7 + $0x38] sm:$0xff]
    %v253 = vld [vmem:[%s7 + $0x40] sm:$0xff]
    %v254 = vld [vmem:[%s7 + $0x48] sm:$0xff]
    %v255 = vld [vmem:[%s7 + $0x50] sm:$0xff]
    %v256 = vld [vmem:[%s7 + $0x58] sm:$0xff]
    %v257 = vld [vmem:[%s7 + $0x60] sm:$0xff]
    %v258 = vld [vmem:[%s7 + $0x68] sm:$0xff]
    %v259 = vld [vmem:[%s7 + $0x70] sm:$0xff]
    %v260 = vld [vmem:[%s7 + $0x78] sm:$0xff]
    %v261 = vld [vmem:[%s8] sm:$0x1]
    %v263 = vlaneseq
    %v264 = vshrl.u32 %v263, 7
    %v265 = vsub.s32 0, %v264
    %v266 = vrot.slane %v261, %v265
    %268 = vmatprep.subr.mxu0 0.0
    %269 = vmatpush1.msra.mxu0 %v260
    %270 = vmatprep.subr.mxu0 0.0
    %271 = vmatpush1.msra.mxu0 %v259
    %272 = vmatprep.subr.mxu0 0.0
    %273 = vmatpush1.msra.mxu0 %v258
    %274 = vmatprep.subr.mxu0 0.0
    %275 = vmatpush1.msra.mxu0 %v257
    %276 = vmatprep.subr.mxu0 0.0
    %277 = vmatpush1.msra.mxu0 %v256
    %278 = vmatprep.subr.mxu0 0.0
    %279 = vmatpush1.msra.mxu0 %v255
    %280 = vmatprep.subr.mxu0 0.0
    %281 = vmatpush1.msra.mxu0 %v254
    %282 = vmatprep.subr.mxu0 0.0
    %283 = vmatpush1.msra.mxu0 %v253
    %284 = vmatprep.subr.mxu0 0.0
    %285 = vmatpush1.msra.mxu0 %v252
    %286 = vmatprep.subr.mxu0 0.0
    %287 = vmatpush1.msra.mxu0 %v251
    %288 = vmatprep.subr.mxu0 0.0
    %289 = vmatpush1.msra.mxu0 %v250
    %290 = vmatprep.subr.mxu0 0.0
    %291 = vmatpush1.msra.mxu0 %v249
    %292 = vmatprep.subr.mxu0 0.0
    %293 = vmatpush1.msra.mxu0 %v248
    %294 = vmatprep.subr.mxu0 0.0
    %295 = vmatpush1.msra.mxu0 %v247
    %296 = vmatprep.subr.mxu0 0.0
    %297 = vmatpush1.msra.mxu0 %v246
    %298 = vmatprep.subr.mxu0 0.0
    %299 = vmatpush1.msra.mxu0 %v245
    %300 = vmatprep.subr.mxu0 0.0
    %301 = vmatpush2.msra.mxu0 0.0
    %302 = vmatprep.subr.mxu0 0.0
    %303 = vmatpush2.msra.mxu0 0.0
    %304 = vmatprep.subr.mxu0 0.0
    %305 = vmatpush2.msra.mxu0 0.0
    %306 = vmatprep.subr.mxu0 0.0
    %307 = vmatpush2.msra.mxu0 0.0
    %308 = vmatprep.subr.mxu0 0.0
    %309 = vmatpush2.msra.mxu0 0.0
    %310 = vmatprep.subr.mxu0 0.0
    %311 = vmatpush2.msra.mxu0 0.0
    %312 = vmatprep.subr.mxu0 0.0
    %313 = vmatpush2.msra.mxu0 0.0
    %314 = vmatprep.subr.mxu0 0.0
    %315 = vmatpush2.msra.mxu0 0.0
    %316 = vmatprep.subr.mxu0 0.0
    %317 = vmatpush2.msra.mxu0 0.0
    %318 = vmatprep.subr.mxu0 0.0
    %319 = vmatpush2.msra.mxu0 0.0
    %320 = vmatprep.subr.mxu0 0.0
    %321 = vmatpush2.msra.mxu0 0.0
    %322 = vmatprep.subr.mxu0 0.0
    %323 = vmatpush2.msra.mxu0 0.0
    %324 = vmatprep.subr.mxu0 0.0
    %325 = vmatpush2.msra.mxu0 0.0
    %326 = vmatprep.subr.mxu0 0.0
    %327 = vmatpush2.msra.mxu0 0.0
    %328 = vmatprep.subr.mxu0 0.0
    %329 = vmatpush2.msra.mxu0 0.0
    %330 = vmatprep.subr.mxu0 0.0
    %331 = vmatpush2.msra.mxu0 0.0
    %332 = vmatprep.mubr.f32.mxu0 0.0
    %333 = vmatmul.mubr.f32.gmra.mxu0 %v244
    %v334 = vpop.f32.mrf.mxu0
    %v335 = vadd.f32 %v266, %v334
    %v336 = vpop.f32.mrf.mxu0
    %337 = vdwg.mxu0
    %338 = vst [vmem:[#allocation2] sm:$0xff] %v335
    // Predicated region
    $region38: #{encoder_mlp_forward.1} parent=1 // pred_check
      _
    $region39: #{encoder_mlp_forward.1} parent=1 // pred_check_branch
      %340 = sbr.rel (0) target = $region41
    $region40: #{encoder_mlp_forward.1} parent=1 // pred_region
      %s342 = ssub.s32 128, 128
      %343 = vsyncadd [#allocation3], %s342
      %s345 = sshll.u32 [#allocation2], 4
      %s346 = int_to_ptr.vmem [resolvable:$true] %s345
      %348 = dma.vmem_to_hbm [thread:$0]  %s346, 128, %s9, [#allocation3]
    $region41: #{encoder_mlp_forward.1} parent=1 // pred_fallthru
      _
    // Predicated region
    $region42: #{encoder_mlp_forward.1} parent=1 // pred_check
      _
    $region43: #{encoder_mlp_forward.1} parent=1 // pred_check_branch
      %350 = sbr.rel (0) target = $region45
    $region44: #{encoder_mlp_forward.1} parent=1 // pred_region
      %351 = dma.done [#allocation3], 128
    $region45: #{encoder_mlp_forward.1} parent=1 // pred_fallthru
      _
    %352 = vsyncpa [#allocation3], 1

</llo_original>
